<compile_context>
chip_gen: v5e
topology: v5e:2x2
jax: 0.10.0
libtpu: 0.0.40
codegen_flags: <defaults>
</compile_context>

<pallas_src>
import functools

import jax
import jax.numpy as jnp
from jax.experimental import pallas as pl
from jax.experimental.pallas import tpu as pltpu


def _round_up(x, m):
    return ((x + m - 1) // m) * m


def _actor_kernel(x_ref, w1_ref, b1_ref, w2_ref, b2_ref, w3_ref, b3_ref,
                  o_ref, *, max_action):
    """Fused 3-layer MLP forward on one batch tile (all operands in VMEM)."""
    cdt = w1_ref.dtype  # MXU operand dtype (bf16 or f32); accumulation is f32.

    x = x_ref[...].astype(cdt)

    # Layer 1: Linear + ReLU
    h1 = jnp.dot(x, w1_ref[...], preferred_element_type=jnp.float32) + b1_ref[...]
    h1 = jnp.maximum(h1, 0.0)

    # Layer 2: Linear + ReLU
    h2 = jnp.dot(h1.astype(cdt), w2_ref[...],
                 preferred_element_type=jnp.float32) + b2_ref[...]
    h2 = jnp.maximum(h2, 0.0)

    # Layer 3: Linear (lane-padded N), slice back to action_dim, Tanh * scale.
    out = jnp.dot(h2.astype(cdt), w3_ref[...],
                  preferred_element_type=jnp.float32) + b3_ref[...]
    a = o_ref.shape[-1]  # true action_dim; w3/b3 are padded, output is not
    o_ref[...] = (jnp.tanh(out[:, :a]) * max_action).astype(o_ref.dtype)


def prepare_actor_params(params, weight_dtype=jnp.bfloat16):
    """One-time prep: cast weights, keep biases f32, lane-pad w3/b3.

    Padding the weight/bias of the last layer (not the output!) gives the MXU
    a clean 128-wide N while keeping HBM output traffic at action_dim columns.
    """
    w1 = params["w1"].astype(weight_dtype)
    w2 = params["w2"].astype(weight_dtype)
    w3 = params["w3"].astype(weight_dtype)
    b1 = params["b1"].astype(jnp.float32)
    b2 = params["b2"].astype(jnp.float32)
    b3 = params["b3"].astype(jnp.float32)

    action_dim = w3.shape[1]
    a_pad = max(128, _round_up(action_dim, 128))
    if a_pad != action_dim:
        w3 = jnp.pad(w3, ((0, 0), (0, a_pad - action_dim)))
        b3 = jnp.pad(b3, ((0, 0), (0, a_pad - action_dim)))

    return {"w1": w1, "b1": b1, "w2": w2, "b2": b2, "w3": w3, "b3": b3,
            "action_dim": action_dim}


def actor_forward(state, prepared, max_action, *, block_batch=512):
    """state: (B, state_dim) f32.  prepared: output of prepare_actor_params."""
    w1, b1 = prepared["w1"], prepared["b1"]
    w2, b2 = prepared["w2"], prepared["b2"]
    w3, b3 = prepared["w3"], prepared["b3"]
    A = prepared["action_dim"]

    B, S = state.shape
    H = w1.shape[1]
    A_pad = w3.shape[1]

    kernel = functools.partial(_actor_kernel, max_action=float(max_action))

    if B <= 128:
        # Tiny batch (e.g. single env step): one invocation, no grid / no
        # pipelining machinery; every operand is a full VMEM-resident array.
        vmem = lambda: pl.BlockSpec(memory_space=pltpu.MemorySpace.VMEM)
        return pl.pallas_call(
            kernel,
            out_shape=jax.ShapeDtypeStruct((B, A), jnp.float32),
            in_specs=[vmem() for _ in range(7)],
            out_specs=vmem(),
        )(state, w1, b1, w2, b2, w3, b3)

    # Gridded path: tile the batch.  Pick the tile so there are >= 2 tiles
    # (keeps both v7x TensorCores busy for medium batches) but cap at
    # block_batch (512 default: big enough that the ~0.35 us per-grid-step
    # overhead is amortized, small enough that VMEM is never a constraint).
    TB = min(block_batch, max(128, _round_up(pl.cdiv(B, 2), 128)))
    nb = pl.cdiv(B, TB)

    # Note: B need not be a multiple of TB; Pallas masks the ragged last tile.
    # Rows are independent, so any junk in the tail of the last input tile
    # only affects output rows that are never written back to HBM.
    return pl.pallas_call(
        kernel,
        out_shape=jax.ShapeDtypeStruct((B, A), jnp.float32),
        grid=(nb,),
        in_specs=[
            pl.BlockSpec((TB, S), lambda i: (i, 0)),      # state tile
            pl.BlockSpec((S, H), lambda i: (0, 0)),       # w1 (VMEM-resident)
            pl.BlockSpec((1, H), lambda i: (0, 0)),       # b1
            pl.BlockSpec((H, H), lambda i: (0, 0)),       # w2 (VMEM-resident)
            pl.BlockSpec((1, H), lambda i: (0, 0)),       # b2
            pl.BlockSpec((H, A_pad), lambda i: (0, 0)),   # w3 (resident, padded)
            pl.BlockSpec((1, A_pad), lambda i: (0, 0)),   # b3 (padded)
        ],
        out_specs=pl.BlockSpec((TB, A), lambda i: (i, 0)),  # unpadded HBM out
        compiler_params=pltpu.CompilerParams(
            dimension_semantics=("parallel",)),
    )(state, w1, b1, w2, b2, w3, b3)


def init_actor_params(key, state_dim, action_dim, hidden=256):
    """Deterministic init mimicking torch.nn.Linear default (U[-1/sqrt(fan_in), +])."""
    ks = jax.random.split(key, 6)

    def linear(kw, kb, fan_in, fan_out):
        bound = 1.0 / jnp.sqrt(fan_in)
        w = jax.random.uniform(kw, (fan_in, fan_out), jnp.float32, -bound, bound)
        b = jax.random.uniform(kb, (1, fan_out), jnp.float32, -bound, bound)
        return w, b

    w1, b1 = linear(ks[0], ks[1], state_dim, hidden)
    w2, b2 = linear(ks[2], ks[3], hidden, hidden)
    w3, b3 = linear(ks[4], ks[5], hidden, action_dim)
    return {"w1": w1, "b1": b1, "w2": w2, "b2": b2, "w3": w3, "b3": b3}


def actor_reference(state, params, max_action):
    h1 = jnp.maximum(state @ params["w1"] + params["b1"], 0.0)
    h2 = jnp.maximum(h1 @ params["w2"] + params["b2"], 0.0)
    return max_action * jnp.tanh(h2 @ params["w3"] + params["b3"])


if __name__ == "__main__":
    key = jax.random.PRNGKey(0)
    k_state, k_params, k_big = jax.random.split(key, 3)

    state_dim = 16
    action_dim = 4
    max_action = 2.0
    raw_params = init_actor_params(k_params, state_dim, action_dim)

    # Params prepared once (cast + pad hoisted out of the forward path).
    params_f32 = prepare_actor_params(raw_params, weight_dtype=jnp.float32)
    params_bf16 = prepare_actor_params(raw_params)  # default bf16 operands

    # --- Small batch: single-invocation (no-grid) path ---
    batch = 8
    state = jax.random.normal(k_state, (batch, state_dim), jnp.float32)
    ref = actor_reference(state, raw_params, max_action)

    out_f32 = jax.block_until_ready(actor_forward(state, params_f32, max_action))
    assert out_f32.shape == (batch, action_dim)
    assert jnp.allclose(out_f32, ref, atol=1e-5, rtol=1e-5), "small-batch f32 mismatch"

    out_bf16 = jax.block_until_ready(actor_forward(state, params_bf16, max_action))
    assert out_bf16.shape == (batch, action_dim)
    assert jnp.allclose(out_bf16, ref, atol=1e-1, rtol=1e-1), "small-batch bf16 mismatch"

    # --- Large batch: batch-tiled grid path, ragged last tile (no host pad) ---
    big_batch = 300  # non-multiple of the batch tile to exercise edge masking
    big_state = jax.random.normal(k_big, (big_batch, state_dim), jnp.float32)
    big_ref = actor_reference(big_state, raw_params, max_action)

    big_f32 = jax.block_until_ready(
        actor_forward(big_state, params_f32, max_action))
    assert big_f32.shape == (big_batch, action_dim)
    assert jnp.allclose(big_f32, big_ref, atol=1e-5, rtol=1e-5), "tiled f32 mismatch"

    big_bf16 = jax.block_until_ready(
        actor_forward(big_state, params_bf16, max_action))
    assert big_bf16.shape == (big_batch, action_dim)
    assert jnp.allclose(big_bf16, big_ref, atol=1e-1, rtol=1e-1), "tiled bf16 mismatch"

    print("KERNEL_OK")
</pallas_src>

<mosaic_0001>
module attributes {stable_mosaic.version = 11 : i64} {
  func.func @_actor_kernel(%arg0: memref<8x16xf32, #tpu.memory_space<vmem>>, %arg1: memref<16x256xf32, #tpu.memory_space<vmem>>, %arg2: memref<1x256xf32, #tpu.memory_space<vmem>>, %arg3: memref<256x256xf32, #tpu.memory_space<vmem>>, %arg4: memref<1x256xf32, #tpu.memory_space<vmem>>, %arg5: memref<256x128xf32, #tpu.memory_space<vmem>>, %arg6: memref<1x128xf32, #tpu.memory_space<vmem>>, %arg7: memref<8x4xf32, #tpu.memory_space<vmem>>) attributes {dimension_semantics = [], scalar_prefetch = 0 : i64, scratch_operands = 0 : i64, tpu.core_type = #tpu.core_type<tc>} {
    %c0 = arith.constant 0 : index
    %c0_0 = arith.constant 0 : index
    %0 = vector.load %arg0[%c0, %c0_0] : memref<8x16xf32, #tpu.memory_space<vmem>>, vector<8x16xf32>
    %c0_1 = arith.constant 0 : index
    %c0_2 = arith.constant 0 : index
    %1 = vector.load %arg1[%c0_1, %c0_2] : memref<16x256xf32, #tpu.memory_space<vmem>>, vector<16x256xf32>
    %cst = arith.constant dense<0.000000e+00> : vector<8x256xf32>
    %2 = tpu.matmul %0, %1, %cst {dimension_numbers = #tpu.dot_dimension_numbers<[1], [0], [0], [1], [0, 0, 1, 1], [], []>} : vector<8x16xf32>, vector<16x256xf32>, vector<8x256xf32> -> vector<8x256xf32>
    %c0_3 = arith.constant 0 : index
    %c0_4 = arith.constant 0 : index
    %3 = vector.load %arg2[%c0_3, %c0_4] : memref<1x256xf32, #tpu.memory_space<vmem>>, vector<1x256xf32>
    %4 = vector.broadcast %3 : vector<1x256xf32> to vector<8x256xf32>
    %5 = arith.addf %2, %4 : vector<8x256xf32>
    %cst_5 = arith.constant 0.000000e+00 : f32
    %6 = vector.broadcast %cst_5 : f32 to vector<8x256xf32>
    %7 = arith.maximumf %5, %6 : vector<8x256xf32>
    %c0_6 = arith.constant 0 : index
    %c0_7 = arith.constant 0 : index
    %8 = vector.load %arg3[%c0_6, %c0_7] : memref<256x256xf32, #tpu.memory_space<vmem>>, vector<256x256xf32>
    %cst_8 = arith.constant dense<0.000000e+00> : vector<8x256xf32>
    %9 = tpu.matmul %7, %8, %cst_8 {dimension_numbers = #tpu.dot_dimension_numbers<[1], [0], [0], [1], [0, 0, 1, 1], [], []>} : vector<8x256xf32>, vector<256x256xf32>, vector<8x256xf32> -> vector<8x256xf32>
    %c0_9 = arith.constant 0 : index
    %c0_10 = arith.constant 0 : index
    %10 = vector.load %arg4[%c0_9, %c0_10] : memref<1x256xf32, #tpu.memory_space<vmem>>, vector<1x256xf32>
    %11 = vector.broadcast %10 : vector<1x256xf32> to vector<8x256xf32>
    %12 = arith.addf %9, %11 : vector<8x256xf32>
    %cst_11 = arith.constant 0.000000e+00 : f32
    %13 = vector.broadcast %cst_11 : f32 to vector<8x256xf32>
    %14 = arith.maximumf %12, %13 : vector<8x256xf32>
    %c0_12 = arith.constant 0 : index
    %c0_13 = arith.constant 0 : index
    %15 = vector.load %arg5[%c0_12, %c0_13] : memref<256x128xf32, #tpu.memory_space<vmem>>, vector<256x128xf32>
    %cst_14 = arith.constant dense<0.000000e+00> : vector<8x128xf32>
    %16 = tpu.matmul %14, %15, %cst_14 {dimension_numbers = #tpu.dot_dimension_numbers<[1], [0], [0], [1], [0, 0, 1, 1], [], []>} : vector<8x256xf32>, vector<256x128xf32>, vector<8x128xf32> -> vector<8x128xf32>
    %c0_15 = arith.constant 0 : index
    %c0_16 = arith.constant 0 : index
    %17 = vector.load %arg6[%c0_15, %c0_16] : memref<1x128xf32, #tpu.memory_space<vmem>>, vector<1x128xf32>
    %18 = vector.broadcast %17 : vector<1x128xf32> to vector<8x128xf32>
    %19 = arith.addf %16, %18 : vector<8x128xf32>
    %20 = vector.extract_strided_slice %19 {offsets = [0, 0], sizes = [8, 4], strides = [1, 1]} : vector<8x128xf32> to vector<8x4xf32>
    %21 = math.tanh %20 : vector<8x4xf32>
    %cst_17 = arith.constant 2.000000e+00 : f32
    %22 = vector.broadcast %cst_17 : f32 to vector<8x4xf32>
    %23 = arith.mulf %21, %22 : vector<8x4xf32>
    %c0_18 = arith.constant 0 : index
    %c0_19 = arith.constant 0 : index
    %24 = vector.load %arg7[%c0_18, %c0_19] : memref<8x4xf32, #tpu.memory_space<vmem>>, vector<8x4xf32>
    tpu.vector_store %arg7[%c0_18, %c0_19], %23 {strides = array<i32>} : memref<8x4xf32, #tpu.memory_space<vmem>>, vector<8x4xf32>,
    return
  }
}

</mosaic_0001>

<llo_original>
// kernel: tpu_custom_call.1
$region0: #{tpu_custom_call.1}
  #allocation0 [shape = 'u32[]', space=smem, size = 0x4, offset = 0x4, fixed_abs, tag = 'smem constant byte address 0x4 - core index']
  #allocation1 [shape = 'u32[72,128]{1,0:T(1,128)}', space=vmem, size = 0x9000, scoped, tag = 'internal scratch']
  %s0 = inlined_call_operand.hbm [shape: f32[8,16], index: 0, kind: input, shape index: {}]
  %s1 = inlined_call_operand.hbm [shape: f32[16,256], index: 1, kind: input, shape index: {}]
  %s2 = inlined_call_operand.hbm [shape: f32[1,256], index: 2, kind: input, shape index: {}]
  %s3 = inlined_call_operand.hbm [shape: f32[256,256], index: 3, kind: input, shape index: {}]
  %s4 = inlined_call_operand.vmem [shape: f32[1,256], index: 4, kind: input, shape index: {}]
  %s5 = inlined_call_operand.hbm [shape: f32[256,128], index: 5, kind: input, shape index: {}]
  %s6 = inlined_call_operand.vmem [shape: f32[1,128], index: 6, kind: input, shape index: {}]
  %s7 = inlined_call_operand.vmem [shape: f32[8,4], index: 7, kind: output, shape index: {}]
  %s8 = sld [smem:[#allocation0]]
  $region58: #{tpu_custom_call.1} parent=0
    _
  %s10 = ssub.s32 1, %s8
  %s11 = scalar_select 0, %s10, %s8
  $region1: #{tpu_custom_call.1} parent=0
    #allocation2 [shape = 'u8[4096]{0}', space=vmem, size = 0x1000, scoped, tag = 'input window, operand 0, single buffered']
    #allocation3 [shape = 's32[1]{0}', space=sflag, size = 0x4, scoped, tag = 'scoped memory for tpu_custom_call.1']
    #allocation4 [shape = 'u8[16384]{0}', space=vmem, size = 0x4000, scoped, tag = 'input window, operand 1, single buffered']
    #allocation5 [shape = 's32[1]{0}', space=sflag, size = 0x4, scoped, tag = 'scoped memory for tpu_custom_call.1']
    #allocation6 [shape = 'u8[1024]{0}', space=vmem, size = 0x400, scoped, tag = 'input window, operand 2, single buffered']
    #allocation7 [shape = 'u8[262144]{0}', space=vmem, size = 0x40000, scoped, tag = 'input window, operand 3, single buffered']
    #allocation8 [shape = 's32[1]{0}', space=sflag, size = 0x4, scoped, tag = 'scoped memory for tpu_custom_call.1']
    #allocation9 [shape = 'u8[131072]{0}', space=vmem, size = 0x20000, scoped, tag = 'input window, operand 5, single buffered']
    %12 = vsyncpa [#allocation3], 0
    %13 = vsyncpa [#allocation5], 0
    %14 = vsyncpa [#allocation8], 0
    // Predicated region
    $region2: #{tpu_custom_call.1} parent=1 // pred_check
      _
    $region3: #{tpu_custom_call.1} parent=1 // pred_check_branch
      %16 = sbr.rel (0) target = $region5
    $region4: #{tpu_custom_call.1} parent=1 // pred_region
      %18 = vsyncadd [#allocation3], 0
      %s20 = sshll.u32 %s0, 4
      %s21 = int_to_ptr.hbm [resolvable:$true] %s20
      %s22 = sshll.u32 [#allocation2], 4
      %s23 = int_to_ptr.vmem [resolvable:$true] %s22
      %25 = dma.hbm_to_vmem [thread:$0]  %s21, 128, %s23, [#allocation3]
    $region5: #{tpu_custom_call.1} parent=1 // pred_fallthru
      _
    // Predicated region
    $region6: #{tpu_custom_call.1} parent=1 // pred_check
      _
    $region7: #{tpu_custom_call.1} parent=1 // pred_check_branch
      %27 = sbr.rel (0) target = $region9
    $region8: #{tpu_custom_call.1} parent=1 // pred_region
      %29 = vsyncadd [#allocation5], 0
      %s30 = sshll.u32 %s1, 4
      %s31 = int_to_ptr.hbm [resolvable:$true] %s30
      %s32 = sshll.u32 [#allocation4], 4
      %s33 = int_to_ptr.vmem [resolvable:$true] %s32
      %38 = dma.hbm_to_vmem [thread:$0]  %s31, 512, %s33, [#allocation5], 256, 256, 16
    $region9: #{tpu_custom_call.1} parent=1 // pred_fallthru
      _
    // Predicated region
    $region10: #{tpu_custom_call.1} parent=1 // pred_check
      _
    $region11: #{tpu_custom_call.1} parent=1 // pred_check_branch
      %40 = sbr.rel (0) target = $region13
    $region12: #{tpu_custom_call.1} parent=1 // pred_region
      %42 = vsyncadd [#allocation5], 0
      %s44 = sshll.u32 %s2, 4
      %s45 = int_to_ptr.hbm [resolvable:$true] %s44
      %s46 = sshll.u32 [#allocation6], 4
      %s47 = int_to_ptr.vmem [resolvable:$true] %s46
      %49 = dma.hbm_to_vmem [thread:$0]  %s45, 32, %s47, [#allocation5]
    $region13: #{tpu_custom_call.1} parent=1 // pred_fallthru
      _
    // Predicated region
    $region14: #{tpu_custom_call.1} parent=1 // pred_check
      _
    $region15: #{tpu_custom_call.1} parent=1 // pred_check_branch
      %51 = sbr.rel (0) target = $region17
    $region16: #{tpu_custom_call.1} parent=1 // pred_region
      %53 = vsyncadd [#allocation8], 0
      %s54 = sshll.u32 %s3, 4
      %s55 = int_to_ptr.hbm [resolvable:$true] %s54
      %s56 = sshll.u32 [#allocation7], 4
      %s57 = int_to_ptr.vmem [resolvable:$true] %s56
      %62 = dma.hbm_to_vmem [thread:$0]  %s55, 8192, %s57, [#allocation8], 256, 256, 16
    $region17: #{tpu_custom_call.1} parent=1 // pred_fallthru
      _
    // Predicated region
    $region18: #{tpu_custom_call.1} parent=1 // pred_check
      _
    $region19: #{tpu_custom_call.1} parent=1 // pred_check_branch
      %64 = sbr.rel (0) target = $region21
    $region20: #{tpu_custom_call.1} parent=1 // pred_region
      _
    $region21: #{tpu_custom_call.1} parent=1 // pred_fallthru
      _
    // Predicated region
    $region22: #{tpu_custom_call.1} parent=1 // pred_check
      _
    $region23: #{tpu_custom_call.1} parent=1 // pred_check_branch
      %66 = sbr.rel (0) target = $region25
    $region24: #{tpu_custom_call.1} parent=1 // pred_region
      %68 = vsyncadd [#allocation8], 0
      %s69 = sshll.u32 %s5, 4
      %s70 = int_to_ptr.hbm [resolvable:$true] %s69
      %s71 = sshll.u32 [#allocation9], 4
      %s72 = int_to_ptr.vmem [resolvable:$true] %s71
      %77 = dma.hbm_to_vmem [thread:$0]  %s70, 4096, %s72, [#allocation8], 128, 128, 8
    $region25: #{tpu_custom_call.1} parent=1 // pred_fallthru
      _
    // Predicated region
    $region26: #{tpu_custom_call.1} parent=1 // pred_check
      _
    $region27: #{tpu_custom_call.1} parent=1 // pred_check_branch
      %79 = sbr.rel (0) target = $region29
    $region28: #{tpu_custom_call.1} parent=1 // pred_region
      _
    $region29: #{tpu_custom_call.1} parent=1 // pred_fallthru
      _
    // Predicated region
    $region30: #{tpu_custom_call.1} parent=1 // pred_check
      _
    $region31: #{tpu_custom_call.1} parent=1 // pred_check_branch
      %81 = sbr.rel (0) target = $region33
    $region32: #{tpu_custom_call.1} parent=1 // pred_region
      %83 = dma.done [#allocation3], 128
    $region33: #{tpu_custom_call.1} parent=1 // pred_fallthru
      _
    // Predicated region
    $region34: #{tpu_custom_call.1} parent=1 // pred_check
      _
    $region35: #{tpu_custom_call.1} parent=1 // pred_check_branch
      %85 = sbr.rel (0) target = $region37
    $region36: #{tpu_custom_call.1} parent=1 // pred_region
      %87 = dma.done [#allocation5], 512
    $region37: #{tpu_custom_call.1} parent=1 // pred_fallthru
      _
    // Predicated region
    $region38: #{tpu_custom_call.1} parent=1 // pred_check
      _
    $region39: #{tpu_custom_call.1} parent=1 // pred_check_branch
      %89 = sbr.rel (0) target = $region41
    $region40: #{tpu_custom_call.1} parent=1 // pred_region
      %91 = dma.done [#allocation5], 32
    $region41: #{tpu_custom_call.1} parent=1 // pred_fallthru
      _
    // Predicated region
    $region42: #{tpu_custom_call.1} parent=1 // pred_check
      _
    $region43: #{tpu_custom_call.1} parent=1 // pred_check_branch
      %93 = sbr.rel (0) target = $region45
    $region44: #{tpu_custom_call.1} parent=1 // pred_region
      %95 = dma.done [#allocation8], 8192
    $region45: #{tpu_custom_call.1} parent=1 // pred_fallthru
      _
    // Predicated region
    $region46: #{tpu_custom_call.1} parent=1 // pred_check
      _
    $region47: #{tpu_custom_call.1} parent=1 // pred_check_branch
      %97 = sbr.rel (0) target = $region49
    $region48: #{tpu_custom_call.1} parent=1 // pred_region
      %99 = dma.done [#allocation8], 4096
    $region49: #{tpu_custom_call.1} parent=1 // pred_fallthru
      _
    %v100 = vld [vmem:[#allocation2] sm:$0xff]
    %v101 = vld [vmem:[#allocation4] sm:$0xff]
    %v102 = vld [vmem:[#allocation4 + $0x8] sm:$0xff]
    %v103 = vld [vmem:[#allocation4 + $0x10] sm:$0xff]
    %v104 = vld [vmem:[#allocation4 + $0x18] sm:$0xff]
    %v105 = vld [vmem:[#allocation6] sm:$0x3]
    %v107 = vperm.slane %v105, 0
    %v108 = vperm.slane %v105, 1
    %vm111 = vcmask 130048
    %v113 = vsel %vm111, %v100, 0
    %115 = vmatpush.msra.mxu0 0.0
    %116 = vmatpush.msra.mxu0 0.0
    %117 = vmatpush.msra.mxu0 0.0
    %118 = vmatpush.msra.mxu0 0.0
    %119 = vmatpush.msra.mxu0 0.0
    %120 = vmatpush.msra.mxu0 0.0
    %121 = vmatpush.msra.mxu0 0.0
    %122 = vmatpush.msra.mxu0 0.0
    %123 = vmatpush.msra.mxu0 0.0
    %124 = vmatpush.msra.mxu0 0.0
    %125 = vmatpush.msra.mxu0 0.0
    %126 = vmatpush.msra.mxu0 0.0
    %127 = vmatpush.msra.mxu0 0.0
    %128 = vmatpush.msra.mxu0 0.0
    %129 = vmatpush.msra.mxu0 %v103
    %130 = vmatpush.msra.mxu0 %v101
    %131 = vmatmul.f32.gmra.mxu0 %v113
    %v132 = vpop.f32.mrf.mxu0
    %v133 = vadd.f32 %v107, %v132
    %134 = vdwg.mxu0
    %135 = vmatpush.msra.mxu0 0.0
    %136 = vmatpush.msra.mxu0 0.0
    %137 = vmatpush.msra.mxu0 0.0
    %138 = vmatpush.msra.mxu0 0.0
    %139 = vmatpush.msra.mxu0 0.0
    %140 = vmatpush.msra.mxu0 0.0
    %141 = vmatpush.msra.mxu0 0.0
    %142 = vmatpush.msra.mxu0 0.0
    %143 = vmatpush.msra.mxu0 0.0
    %144 = vmatpush.msra.mxu0 0.0
    %145 = vmatpush.msra.mxu0 0.0
    %146 = vmatpush.msra.mxu0 0.0
    %147 = vmatpush.msra.mxu0 0.0
    %148 = vmatpush.msra.mxu0 0.0
    %149 = vmatpush.msra.mxu0 %v104
    %150 = vmatpush.msra.mxu0 %v102
    %151 = vmatmul.f32.gmra.mxu0 %v113
    %v152 = vpop.f32.mrf.mxu0
    %v153 = vadd.f32 %v108, %v152
    %154 = vdwg.mxu0
    %v155 = vmax.f32 %v133, 0.0
    %v156 = vmax.f32 %v153, 0.0
    %v157 = vld [vmem:[#allocation7] sm:$0xff]
    %v158 = vld [vmem:[#allocation7 + $0x8] sm:$0xff]
    %v159 = vld [vmem:[#allocation7 + $0x10] sm:$0xff]
    %v160 = vld [vmem:[#allocation7 + $0x18] sm:$0xff]
    %v161 = vld [vmem:[#allocation7 + $0x20] sm:$0xff]
    %v162 = vld [vmem:[#allocation7 + $0x28] sm:$0xff]
    %v163 = vld [vmem:[#allocation7 + $0x30] sm:$0xff]
    %v164 = vld [vmem:[#allocation7 + $0x38] sm:$0xff]
    %v165 = vld [vmem:[#allocation7 + $0x40] sm:$0xff]
    %v166 = vld [vmem:[#allocation7 + $0x48] sm:$0xff]
    %v167 = vld [vmem:[#allocation7 + $0x50] sm:$0xff]
    %v168 = vld [vmem:[#allocation7 + $0x58] sm:$0xff]
    %v169 = vld [vmem:[#allocation7 + $0x60] sm:$0xff]
    %v170 = vld [vmem:[#allocation7 + $0x68] sm:$0xff]
    %v171 = vld [vmem:[#allocation7 + $0x70] sm:$0xff]
    %v172 = vld [vmem:[#allocation7 + $0x78] sm:$0xff]
    %v173 = vld [vmem:[#allocation7 + $0x80] sm:$0xff]
    %v174 = vld [vmem:[#allocation7 + $0x88] sm:$0xff]
    %v175 = vld [vmem:[#allocation7 + $0x90] sm:$0xff]
    %v176 = vld [vmem:[#allocation7 + $0x98] sm:$0xff]
    %v177 = vld [vmem:[#allocation7 + $0xa0] sm:$0xff]
    %v178 = vld [vmem:[#allocation7 + $0xa8] sm:$0xff]
    %v179 = vld [vmem:[#allocation7 + $0xb0] sm:$0xff]
    %v180 = vld [vmem:[#allocation7 + $0xb8] sm:$0xff]
    %v181 = vld [vmem:[#allocation7 + $0xc0] sm:$0xff]
    %v182 = vld [vmem:[#allocation7 + $0xc8] sm:$0xff]
    %v183 = vld [vmem:[#allocation7 + $0xd0] sm:$0xff]
    %v184 = vld [vmem:[#allocation7 + $0xd8] sm:$0xff]
    %v185 = vld [vmem:[#allocation7 + $0xe0] sm:$0xff]
    %v186 = vld [vmem:[#allocation7 + $0xe8] sm:$0xff]
    %v187 = vld [vmem:[#allocation7 + $0xf0] sm:$0xff]
    %v188 = vld [vmem:[#allocation7 + $0xf8] sm:$0xff]
    %v189 = vld [vmem:[#allocation7 + $0x100] sm:$0xff]
    %v190 = vld [vmem:[#allocation7 + $0x108] sm:$0xff]
    %v191 = vld [vmem:[#allocation7 + $0x110] sm:$0xff]
    %v192 = vld [vmem:[#allocation7 + $0x118] sm:$0xff]
    %v193 = vld [vmem:[#allocation7 + $0x120] sm:$0xff]
    %v194 = vld [vmem:[#allocation7 + $0x128] sm:$0xff]
    %v195 = vld [vmem:[#allocation7 + $0x130] sm:$0xff]
    %v196 = vld [vmem:[#allocation7 + $0x138] sm:$0xff]
    %v197 = vld [vmem:[#allocation7 + $0x140] sm:$0xff]
    %v198 = vld [vmem:[#allocation7 + $0x148] sm:$0xff]
    %v199 = vld [vmem:[#allocation7 + $0x150] sm:$0xff]
    %v200 = vld [vmem:[#allocation7 + $0x158] sm:$0xff]
    %v201 = vld [vmem:[#allocation7 + $0x160] sm:$0xff]
    %v202 = vld [vmem:[#allocation7 + $0x168] sm:$0xff]
    %v203 = vld [vmem:[#allocation7 + $0x170] sm:$0xff]
    %v204 = vld [vmem:[#allocation7 + $0x178] sm:$0xff]
    %v205 = vld [vmem:[#allocation7 + $0x180] sm:$0xff]
    %v206 = vld [vmem:[#allocation7 + $0x188] sm:$0xff]
    %v207 = vld [vmem:[#allocation7 + $0x190] sm:$0xff]
    %v208 = vld [vmem:[#allocation7 + $0x198] sm:$0xff]
    %v209 = vld [vmem:[#allocation7 + $0x1a0] sm:$0xff]
    %v210 = vld [vmem:[#allocation7 + $0x1a8] sm:$0xff]
    %v211 = vld [vmem:[#allocation7 + $0x1b0] sm:$0xff]
    %v212 = vld [vmem:[#allocation7 + $0x1b8] sm:$0xff]
    %v213 = vld [vmem:[#allocation7 + $0x1c0] sm:$0xff]
    %v214 = vld [vmem:[#allocation7 + $0x1c8] sm:$0xff]
    %v215 = vld [vmem:[#allocation7 + $0x1d0] sm:$0xff]
    %v216 = vld [vmem:[#allocation7 + $0x1d8] sm:$0xff]
    %v217 = vld [vmem:[#allocation7 + $0x1e0] sm:$0xff]
    %v218 = vld [vmem:[#allocation7 + $0x1e8] sm:$0xff]
    %v219 = vld [vmem:[#allocation7 + $0x1f0] sm:$0xff]
    %v220 = vld [vmem:[#allocation7 + $0x1f8] sm:$0xff]
    %v221 = vld [vmem:[%s4] sm:$0x3]
    %v223 = vperm.slane %v221, 0
    %v224 = vperm.slane %v221, 1
    %227 = vmatpush.msra.mxu0 %v187
    %228 = vmatpush.msra.mxu0 %v185
    %229 = vmatpush.msra.mxu0 %v183
    %230 = vmatpush.msra.mxu0 %v181
    %231 = vmatpush.msra.mxu0 %v179
    %232 = vmatpush.msra.mxu0 %v177
    %233 = vmatpush.msra.mxu0 %v175
    %234 = vmatpush.msra.mxu0 %v173
    %235 = vmatpush.msra.mxu0 %v171
    %236 = vmatpush.msra.mxu0 %v169
    %237 = vmatpush.msra.mxu0 %v167
    %238 = vmatpush.msra.mxu0 %v165
    %239 = vmatpush.msra.mxu0 %v163
    %240 = vmatpush.msra.mxu0 %v161
    %241 = vmatpush.msra.mxu0 %v159
    %242 = vmatpush.msra.mxu0 %v157
    %243 = vmatmul.f32.gmra.mxu0 %v155
    %v244 = vpop.f32.mrf.mxu0
    %v245 = vadd.f32 %v223, %v244
    %246 = vdwg.mxu0
    %247 = vmatpush.msra.mxu0 %v219
    %248 = vmatpush.msra.mxu0 %v217
    %249 = vmatpush.msra.mxu0 %v215
    %250 = vmatpush.msra.mxu0 %v213
    %251 = vmatpush.msra.mxu0 %v211
    %252 = vmatpush.msra.mxu0 %v209
    %253 = vmatpush.msra.mxu0 %v207
    %254 = vmatpush.msra.mxu0 %v205
    %255 = vmatpush.msra.mxu0 %v203
    %256 = vmatpush.msra.mxu0 %v201
    %257 = vmatpush.msra.mxu0 %v199
    %258 = vmatpush.msra.mxu0 %v197
    %259 = vmatpush.msra.mxu0 %v195
    %260 = vmatpush.msra.mxu0 %v193
    %261 = vmatpush.msra.mxu0 %v191
    %262 = vmatpush.msra.mxu0 %v189
    %263 = vmatmul.f32.gmra.mxu0 %v156
    %v264 = vpop.f32.mrf.mxu0
    %v265 = vadd.f32 %v245, %v264
    %266 = vdwg.mxu0
    %267 = vmatpush.msra.mxu0 %v188
    %268 = vmatpush.msra.mxu0 %v186
    %269 = vmatpush.msra.mxu0 %v184
    %270 = vmatpush.msra.mxu0 %v182
    %271 = vmatpush.msra.mxu0 %v180
    %272 = vmatpush.msra.mxu0 %v178
    %273 = vmatpush.msra.mxu0 %v176
    %274 = vmatpush.msra.mxu0 %v174
    %275 = vmatpush.msra.mxu0 %v172
    %276 = vmatpush.msra.mxu0 %v170
    %277 = vmatpush.msra.mxu0 %v168
    %278 = vmatpush.msra.mxu0 %v166
    %279 = vmatpush.msra.mxu0 %v164
    %280 = vmatpush.msra.mxu0 %v162
    %281 = vmatpush.msra.mxu0 %v160
    %282 = vmatpush.msra.mxu0 %v158
    %283 = vmatmul.f32.gmra.mxu0 %v155
    %v284 = vpop.f32.mrf.mxu0
    %v285 = vadd.f32 %v224, %v284
    %286 = vdwg.mxu0
    %287 = vmatpush.msra.mxu0 %v220
    %288 = vmatpush.msra.mxu0 %v218
    %289 = vmatpush.msra.mxu0 %v216
    %290 = vmatpush.msra.mxu0 %v214
    %291 = vmatpush.msra.mxu0 %v212
    %292 = vmatpush.msra.mxu0 %v210
    %293 = vmatpush.msra.mxu0 %v208
    %294 = vmatpush.msra.mxu0 %v206
    %295 = vmatpush.msra.mxu0 %v204
    %296 = vmatpush.msra.mxu0 %v202
    %297 = vmatpush.msra.mxu0 %v200
    %298 = vmatpush.msra.mxu0 %v198
    %299 = vmatpush.msra.mxu0 %v196
    %300 = vmatpush.msra.mxu0 %v194
    %301 = vmatpush.msra.mxu0 %v192
    %302 = vmatpush.msra.mxu0 %v190
    %303 = vmatmul.f32.gmra.mxu0 %v156
    %v304 = vpop.f32.mrf.mxu0
    %v305 = vadd.f32 %v285, %v304
    %306 = vdwg.mxu0
    %v307 = vmax.f32 %v265, 0.0
    %v308 = vmax.f32 %v305, 0.0
    %v309 = vld [vmem:[#allocation9] sm:$0xff]
    %v310 = vld [vmem:[#allocation9 + $0x8] sm:$0xff]
    %v311 = vld [vmem:[#allocation9 + $0x10] sm:$0xff]
    %v312 = vld [vmem:[#allocation9 + $0x18] sm:$0xff]
    %v313 = vld [vmem:[#allocation9 + $0x20] sm:$0xff]
    %v314 = vld [vmem:[#allocation9 + $0x28] sm:$0xff]
    %v315 = vld [vmem:[#allocation9 + $0x30] sm:$0xff]
    %v316 = vld [vmem:[#allocation9 + $0x38] sm:$0xff]
    %v317 = vld [vmem:[#allocation9 + $0x40] sm:$0xff]
    %v318 = vld [vmem:[#allocation9 + $0x48] sm:$0xff]
    %v319 = vld [vmem:[#allocation9 + $0x50] sm:$0xff]
    %v320 = vld [vmem:[#allocation9 + $0x58] sm:$0xff]
    %v321 = vld [vmem:[#allocation9 + $0x60] sm:$0xff]
    %v322 = vld [vmem:[#allocation9 + $0x68] sm:$0xff]
    %v323 = vld [vmem:[#allocation9 + $0x70] sm:$0xff]
    %v324 = vld [vmem:[#allocation9 + $0x78] sm:$0xff]
    %v325 = vld [vmem:[#allocation9 + $0x80] sm:$0xff]
    %v326 = vld [vmem:[#allocation9 + $0x88] sm:$0xff]
    %v327 = vld [vmem:[#allocation9 + $0x90] sm:$0xff]
    %v328 = vld [vmem:[#allocation9 + $0x98] sm:$0xff]
    %v329 = vld [vmem:[#allocation9 + $0xa0] sm:$0xff]
    %v330 = vld [vmem:[#allocation9 + $0xa8] sm:$0xff]
    %v331 = vld [vmem:[#allocation9 + $0xb0] sm:$0xff]
    %v332 = vld [vmem:[#allocation9 + $0xb8] sm:$0xff]
    %v333 = vld [vmem:[#allocation9 + $0xc0] sm:$0xff]
    %v334 = vld [vmem:[#allocation9 + $0xc8] sm:$0xff]
    %v335 = vld [vmem:[#allocation9 + $0xd0] sm:$0xff]
    %v336 = vld [vmem:[#allocation9 + $0xd8] sm:$0xff]
    %v337 = vld [vmem:[#allocation9 + $0xe0] sm:$0xff]
    %v338 = vld [vmem:[#allocation9 + $0xe8] sm:$0xff]
    %v339 = vld [vmem:[#allocation9 + $0xf0] sm:$0xff]
    %v340 = vld [vmem:[#allocation9 + $0xf8] sm:$0xff]
    %v341 = vld [vmem:[%s6] sm:$0x1]
    %v343 = vperm.slane %v341, 0
    %345 = vmatpush.msra.mxu0 %v324
    %346 = vmatpush.msra.mxu0 %v323
    %347 = vmatpush.msra.mxu0 %v322
    %348 = vmatpush.msra.mxu0 %v321
    %349 = vmatpush.msra.mxu0 %v320
    %350 = vmatpush.msra.mxu0 %v319
    %351 = vmatpush.msra.mxu0 %v318
    %352 = vmatpush.msra.mxu0 %v317
    %353 = vmatpush.msra.mxu0 %v316
    %354 = vmatpush.msra.mxu0 %v315
    %355 = vmatpush.msra.mxu0 %v314
    %356 = vmatpush.msra.mxu0 %v313
    %357 = vmatpush.msra.mxu0 %v312
    %358 = vmatpush.msra.mxu0 %v311
    %359 = vmatpush.msra.mxu0 %v310
    %360 = vmatpush.msra.mxu0 %v309
    %361 = vmatmul.f32.gmra.mxu0 %v307
    %v362 = vpop.f32.mrf.mxu0
    %v363 = vadd.f32 %v343, %v362
    %364 = vdwg.mxu0
    %365 = vmatpush.msra.mxu0 %v340
    %366 = vmatpush.msra.mxu0 %v339
    %367 = vmatpush.msra.mxu0 %v338
    %368 = vmatpush.msra.mxu0 %v337
    %369 = vmatpush.msra.mxu0 %v336
    %370 = vmatpush.msra.mxu0 %v335
    %371 = vmatpush.msra.mxu0 %v334
    %372 = vmatpush.msra.mxu0 %v333
    %373 = vmatpush.msra.mxu0 %v332
    %374 = vmatpush.msra.mxu0 %v331
    %375 = vmatpush.msra.mxu0 %v330
    %376 = vmatpush.msra.mxu0 %v329
    %377 = vmatpush.msra.mxu0 %v328
    %378 = vmatpush.msra.mxu0 %v327
    %379 = vmatpush.msra.mxu0 %v326
    %380 = vmatpush.msra.mxu0 %v325
    %381 = vmatmul.f32.gmra.mxu0 %v308
    %v382 = vpop.f32.mrf.mxu0
    %v383 = vadd.f32 %v363, %v382
    %384 = vdwg.mxu0
    %v385 = vtanh.pop %v383
    %v386 = vmul.f32 %v385, 2.0
    %vm387 = vcmask 31744
    %388 = vst.msk [vmem:[%s7] sm:$0xff] %vm387, %v386
    // Predicated region
    $region50: #{tpu_custom_call.1} parent=1 // pred_check
      _
    $region51: #{tpu_custom_call.1} parent=1 // pred_check_branch
      %390 = sbr.rel (0) target = $region53
    $region52: #{tpu_custom_call.1} parent=1 // pred_region
      _
    $region53: #{tpu_custom_call.1} parent=1 // pred_fallthru
      _
    // Predicated region
    $region54: #{tpu_custom_call.1} parent=1 // pred_check
      _
    $region55: #{tpu_custom_call.1} parent=1 // pred_check_branch
      %392 = sbr.rel (0) target = $region57
    $region56: #{tpu_custom_call.1} parent=1 // pred_region
      _
    $region57: #{tpu_custom_call.1} parent=1 // pred_fallthru
      _
    %393 = vsyncpa [#allocation3], 1
    %394 = vsyncpa [#allocation5], 1
    %395 = vsyncpa [#allocation8], 1

</llo_original>
